<compile_context>
chip_gen: v5e
topology: v5e:2x2
jax: 0.10.0
libtpu: 0.0.40
codegen_flags: <defaults>
</compile_context>

<pallas_src>
import functools

import jax
import jax.numpy as jnp
from jax import lax
from jax.experimental import pallas as pl
from jax.experimental.pallas import tpu as pltpu


def _sepconv_kernel(x_ref, w_ref, b_ref, o_ref, *, KH, KW, W, HW):
    """One grid step: Nb images, fused depthwise+pointwise as one matmul each.

    x_ref : (Nb, Cin, H*W)     NCHW flattened over H,W (input dtype, f32)
    w_ref : (Cout, KH*KW*Cin)  fused depthwise+pointwise weight (compute dtype)
    b_ref : (Cout, 1)          fused bias (f32)
    o_ref : (Nb, Cout, H*W)    lane-dense output; the last KH-1 rows / KW-1
                               cols of each HxW image are junk (cropped later)
    """
    Nb, Cin, _ = x_ref.shape
    K_eff = KH * KW * Cin

    for b in range(Nb):  # static unroll; Nb is small by construction
        # Early cast to the MXU operand dtype: everything below (rolls, stack,
        # reshape) is pure data movement, so bf16 halves vreg traffic.  The
        # bias add stays on the f32 accumulator (v5e-safe).
        xb = x_ref[b].astype(w_ref.dtype)                      # (Cin, H*W)

        # im2col via aligned lane rotations: tap (kh, kw) needs x[i + kh*W+kw],
        # i.e. a left-rotate by kh*W+kw == jnp.roll by HW - (kh*W+kw).
        taps = []
        for kh in range(KH):
            for kw in range(KW):
                off = kh * W + kw
                taps.append(xb if off == 0
                            else pltpu.roll(xb, shift=HW - off, axis=1))
        patches = jnp.stack(taps, axis=0).reshape(K_eff, HW)    # (K_eff, H*W)

        # One fused MXU matmul (Cout, K_eff) x (K_eff, H*W), f32 accumulation.
        out = jnp.dot(w_ref[...], patches,
                      preferred_element_type=jnp.float32)
        out = out + b_ref[...]                                  # f32 bias add
        o_ref[b] = out.astype(o_ref.dtype)


def _pick_batch_block(N, per_image_bytes, vmem_budget=1 << 20):
    """Largest divisor of N that (a) keeps >= 2 grid steps when N >= 2 (so the
    parallel axis can feed both v7x TensorCores) and (b) keeps the input block
    small enough to sit comfortably under v5e's 16 MiB default scoped VMEM."""
    best = 1
    for nb in range(1, N + 1):
        if N % nb:
            continue
        if nb * per_image_bytes > vmem_budget:
            break
        if N >= 2 and N // nb < 2:
            break
        best = nb
    return best


def separable_conv2d(x_nchw, w_dw, b_dw, w_pw, b_pw, *, kernel_size=3, stride=1,
                     padding=0, compute_dtype=jnp.bfloat16, batch_block=None,
                     crop_output=True):
    """Fused Pallas SeparableConv2D forward.  x_nchw: (N, Cin, H, W) float32."""
    assert stride == 1 and padding == 0, "only the module defaults are implemented"
    N, Cin, H, W = x_nchw.shape
    Cout = w_dw.shape[0]
    assert Cout % Cin == 0, "groups=in_ch requires out_ch % in_ch == 0"
    mult = Cout // Cin
    KH = KW = kernel_size
    H_out = H - KH + 1
    W_out = W - KW + 1
    K_eff = KH * KW * Cin
    HW = H * W

    f32 = jnp.float32
    hi = jax.lax.Precision.HIGHEST

    # --- fold depthwise (grouped) conv + 1x1 pointwise conv into one matmul ---
    # K ordering of the folded weight is (kh, kw, cin)-major, matching the
    # stack/reshape order of `patches` in the kernel.
    co = jnp.arange(Cout)
    ci = jnp.arange(Cin)
    chan_mask = (ci[:, None] == (co[None, :] // mult)).astype(f32)       # (Cin, Cout)
    wd_hwc = jnp.transpose(w_dw[:, 0, :, :], (1, 2, 0))                  # (KH, KW, Cout)
    wd_dense = (wd_hwc[:, :, None, :] * chan_mask[None, None]).reshape(K_eff, Cout)
    wp_mat = jnp.transpose(w_pw[:, :, 0, 0], (1, 0))                     # (ci, co)
    w_eff_t = jnp.dot(wd_dense, wp_mat, precision=hi).T.astype(compute_dtype)  # (Cout, K_eff)
    b_eff = (jnp.dot(b_dw, wp_mat, precision=hi) + b_pw).astype(f32)[:, None]  # (Cout, 1)

    # NCHW stays NCHW: flattening H,W is a free reshape, no transpose.
    x_flat = x_nchw.reshape(N, Cin, HW)

    if batch_block is None:
        batch_block = _pick_batch_block(N, Cin * HW * x_nchw.dtype.itemsize)
    assert N % batch_block == 0, (N, batch_block)
    grid_len = N // batch_block

    kernel = functools.partial(_sepconv_kernel, KH=KH, KW=KW, W=W, HW=HW)

    # Deeper input pipelining only pays off once the grid is long enough.
    x_spec_kwargs = {}
    if grid_len >= 4:
        x_spec_kwargs["pipeline_mode"] = pl.Buffered(3)

    # cost_estimate reflects the fused dense-conv formulation (overstates the
    # algorithmic separable FLOPs; kept consistent with what the MXU executes).
    flops = 2 * N * Cout * K_eff * HW
    bytes_accessed = int(
        x_flat.size * x_flat.dtype.itemsize
        + w_eff_t.size * w_eff_t.dtype.itemsize
        + b_eff.size * b_eff.dtype.itemsize
        + N * Cout * HW * x_nchw.dtype.itemsize)

    out_flat = pl.pallas_call(
        kernel,
        out_shape=jax.ShapeDtypeStruct((N, Cout, HW), x_nchw.dtype),
        grid_spec=pltpu.PrefetchScalarGridSpec(
            num_scalar_prefetch=0,
            grid=(grid_len,),
            in_specs=[
                pl.BlockSpec((batch_block, Cin, HW), lambda n: (n, 0, 0),
                             **x_spec_kwargs),
                pl.BlockSpec((Cout, K_eff), lambda n: (0, 0)),
                pl.BlockSpec((Cout, 1), lambda n: (0, 0)),
            ],
            out_specs=pl.BlockSpec((batch_block, Cout, HW), lambda n: (n, 0, 0)),
        ),
        compiler_params=pltpu.CompilerParams(
            dimension_semantics=("parallel",)),
        cost_estimate=pl.CostEstimate(flops=flops, transcendentals=0,
                                      bytes_accessed=bytes_accessed),
    )(x_flat, w_eff_t, b_eff)

    # (N, Cout, H*W) -> (N, Cout, H, W) is a free reshape (already NCHW).
    out = out_flat.reshape(N, Cout, H, W)
    if crop_output:
        # Extra HBM pass; callers that can fuse the crop downstream should pass
        # crop_output=False and slice [:, :, :H_out, :W_out] themselves.
        out = out[:, :, :H_out, :W_out]
    return out


def _reference(x_nchw, w_dw, b_dw, w_pw, b_pw):
    """Plain-JAX reference matching PyTorch Conv2d semantics (NCHW / OIHW)."""
    Cin = x_nchw.shape[1]
    dn = ("NCHW", "OIHW", "NCHW")
    out = lax.conv_general_dilated(
        x_nchw, w_dw, window_strides=(1, 1), padding="VALID",
        dimension_numbers=dn, feature_group_count=Cin)
    out = out + b_dw[None, :, None, None]
    out = lax.conv_general_dilated(
        out, w_pw, window_strides=(1, 1), padding="VALID",
        dimension_numbers=dn)
    out = out + b_pw[None, :, None, None]
    return out


if __name__ == "__main__":
    # Small module-consistent shapes: batch=2, in_ch=4, out_ch=8 (multiple of
    # in_ch, required by groups=in_ch), spatial 16x16, kernel 3.
    N, Cin, H, W = 2, 4, 16, 16
    Cout, K = 8, 3

    key = jax.random.PRNGKey(0)
    k0, k1, k2, k3, k4 = jax.random.split(key, 5)

    x = jax.random.normal(k0, (N, Cin, H, W), dtype=jnp.float32)
    w_dw = jax.random.normal(k1, (Cout, 1, K, K), dtype=jnp.float32) * 0.1   # (out, 1, K, K)
    b_dw = jax.random.normal(k2, (Cout,), dtype=jnp.float32) * 0.1
    w_pw = jax.random.normal(k3, (Cout, Cout, 1, 1), dtype=jnp.float32) * 0.1
    b_pw = jax.random.normal(k4, (Cout,), dtype=jnp.float32) * 0.1

    ref = _reference(x, w_dw, b_dw, w_pw, b_pw)

    # Exact-semantics path: f32 matmul operands.
    out_f32 = jax.block_until_ready(
        separable_conv2d(x, w_dw, b_dw, w_pw, b_pw, kernel_size=K,
                         compute_dtype=jnp.float32))
    assert out_f32.shape == (N, Cout, H - K + 1, W - K + 1), out_f32.shape
    assert jnp.allclose(out_f32, ref, atol=5e-4, rtol=5e-4), \
        float(jnp.max(jnp.abs(out_f32 - ref)))

    # Fast path: bf16 MXU operands, f32 accumulation (v6e/v7x recommendation).
    out_bf16 = jax.block_until_ready(
        separable_conv2d(x, w_dw, b_dw, w_pw, b_pw, kernel_size=K,
                         compute_dtype=jnp.bfloat16))
    assert out_bf16.shape == ref.shape, out_bf16.shape
    assert jnp.allclose(out_bf16, ref, atol=3e-2, rtol=3e-2), \
        float(jnp.max(jnp.abs(out_bf16 - ref)))

    print("KERNEL_OK")
</pallas_src>

<mosaic_0001>
module attributes {stable_mosaic.version = 11 : i64} {
  func.func @_sepconv_kernel(%arg0: i32, %arg1: memref<1x4x256xf32, #tpu.memory_space<vmem>>, %arg2: memref<8x36xf32, #tpu.memory_space<vmem>>, %arg3: memref<8x1xf32, #tpu.memory_space<vmem>>, %arg4: memref<1x8x256xf32, #tpu.memory_space<vmem>>) attributes {dimension_semantics = [#tpu.dimension_semantics<parallel>], iteration_bounds = array<i64: 2>, scalar_prefetch = 0 : i64, scratch_operands = 0 : i64, tpu.core_type = #tpu.core_type<tc>, window_params = [{transform_indices = @transform_0, window_bounds = array<i64: 1, 4, 256>}, {pipeline_mode = #tpu.pipeline_mode<synchronous>, transform_indices = @transform_1, window_bounds = array<i64: 8, 36>}, {pipeline_mode = #tpu.pipeline_mode<synchronous>, transform_indices = @transform_2, window_bounds = array<i64: 8, 1>}, {transform_indices = @transform_3, window_bounds = array<i64: 1, 8, 256>}]} {
    %c0 = arith.constant 0 : index
    %c0_0 = arith.constant 0 : index
    %c0_1 = arith.constant 0 : index
    %0 = vector.load %arg1[%c0, %c0_0, %c0_1] : memref<1x4x256xf32, #tpu.memory_space<vmem>>, vector<1x4x256xf32>
    %1 = vector.shape_cast %0 : vector<1x4x256xf32> to vector<4x256xf32>
    %c255_i32 = arith.constant 255 : i32
    %2 = tpu.dynamic_rotate %1 by %c255_i32 dim 1 : vector<4x256xf32>, i32 -> vector<4x256xf32>
    %c254_i32 = arith.constant 254 : i32
    %3 = tpu.dynamic_rotate %1 by %c254_i32 dim 1 : vector<4x256xf32>, i32 -> vector<4x256xf32>
    %c240_i32 = arith.constant 240 : i32
    %4 = tpu.dynamic_rotate %1 by %c240_i32 dim 1 : vector<4x256xf32>, i32 -> vector<4x256xf32>
    %c239_i32 = arith.constant 239 : i32
    %5 = tpu.dynamic_rotate %1 by %c239_i32 dim 1 : vector<4x256xf32>, i32 -> vector<4x256xf32>
    %c238_i32 = arith.constant 238 : i32
    %6 = tpu.dynamic_rotate %1 by %c238_i32 dim 1 : vector<4x256xf32>, i32 -> vector<4x256xf32>
    %c224_i32 = arith.constant 224 : i32
    %7 = tpu.dynamic_rotate %1 by %c224_i32 dim 1 : vector<4x256xf32>, i32 -> vector<4x256xf32>
    %c223_i32 = arith.constant 223 : i32
    %8 = tpu.dynamic_rotate %1 by %c223_i32 dim 1 : vector<4x256xf32>, i32 -> vector<4x256xf32>
    %c222_i32 = arith.constant 222 : i32
    %9 = tpu.dynamic_rotate %1 by %c222_i32 dim 1 : vector<4x256xf32>, i32 -> vector<4x256xf32>
    %10 = vector.shape_cast %1 : vector<4x256xf32> to vector<1x4x256xf32>
    %11 = vector.shape_cast %2 : vector<4x256xf32> to vector<1x4x256xf32>
    %12 = vector.shape_cast %3 : vector<4x256xf32> to vector<1x4x256xf32>
    %13 = vector.shape_cast %4 : vector<4x256xf32> to vector<1x4x256xf32>
    %14 = vector.shape_cast %5 : vector<4x256xf32> to vector<1x4x256xf32>
    %15 = vector.shape_cast %6 : vector<4x256xf32> to vector<1x4x256xf32>
    %16 = vector.shape_cast %7 : vector<4x256xf32> to vector<1x4x256xf32>
    %17 = vector.shape_cast %8 : vector<4x256xf32> to vector<1x4x256xf32>
    %18 = vector.shape_cast %9 : vector<4x256xf32> to vector<1x4x256xf32>
    %19 = tpu.concatenate %10, %11, %12, %13, %14, %15, %16, %17, %18 in 0 : vector<1x4x256xf32>, vector<1x4x256xf32>, vector<1x4x256xf32>, vector<1x4x256xf32>, vector<1x4x256xf32>, vector<1x4x256xf32>, vector<1x4x256xf32>, vector<1x4x256xf32>, vector<1x4x256xf32> -> vector<9x4x256xf32>
    %20 = vector.shape_cast %19 : vector<9x4x256xf32> to vector<36x256xf32>
    %c0_2 = arith.constant 0 : index
    %c0_3 = arith.constant 0 : index
    %21 = vector.load %arg2[%c0_2, %c0_3] : memref<8x36xf32, #tpu.memory_space<vmem>>, vector<8x36xf32>
    %cst = arith.constant dense<0.000000e+00> : vector<8x256xf32>
    %22 = tpu.matmul %21, %20, %cst {dimension_numbers = #tpu.dot_dimension_numbers<[1], [0], [0], [1], [0, 0, 1, 1], [], []>} : vector<8x36xf32>, vector<36x256xf32>, vector<8x256xf32> -> vector<8x256xf32>
    %c0_4 = arith.constant 0 : index
    %c0_5 = arith.constant 0 : index
    %23 = vector.load %arg3[%c0_4, %c0_5] : memref<8x1xf32, #tpu.memory_space<vmem>>, vector<8x1xf32>
    %24 = vector.broadcast %23 : vector<8x1xf32> to vector<8x256xf32>
    %25 = arith.addf %22, %24 : vector<8x256xf32>
    %c0_6 = arith.constant 0 : index
    %c0_7 = arith.constant 0 : index
    %c0_8 = arith.constant 0 : index
    %26 = vector.load %arg4[%c0_6, %c0_7, %c0_8] : memref<1x8x256xf32, #tpu.memory_space<vmem>>, vector<1x8x256xf32>
    %27 = vector.shape_cast %26 : vector<1x8x256xf32> to vector<8x256xf32>
    %28 = vector.shape_cast %25 : vector<8x256xf32> to vector<1x8x256xf32>
    tpu.vector_store %arg4[%c0_6, %c0_7, %c0_8], %28 {strides = array<i32>} : memref<1x8x256xf32, #tpu.memory_space<vmem>>, vector<1x8x256xf32>,
    return
  }
  func.func @transform_0(%arg0: i32) -> (i32, i32, i32) {
    %c0_i32 = arith.constant 0 : i32
    %c0_i32_0 = arith.constant 0 : i32
    %c0_i32_1 = arith.constant 0 : i32
    return %arg0, %c0_i32, %c0_i32_0 : i32, i32, i32
  }
  func.func @transform_1(%arg0: i32) -> (i32, i32) {
    %c0_i32 = arith.constant 0 : i32
    %c0_i32_0 = arith.constant 0 : i32
    %c0_i32_1 = arith.constant 0 : i32
    return %c0_i32, %c0_i32_0 : i32, i32
  }
  func.func @transform_2(%arg0: i32) -> (i32, i32) {
    %c0_i32 = arith.constant 0 : i32
    %c0_i32_0 = arith.constant 0 : i32
    %c0_i32_1 = arith.constant 0 : i32
    return %c0_i32, %c0_i32_0 : i32, i32
  }
  func.func @transform_3(%arg0: i32) -> (i32, i32, i32) {
    %c0_i32 = arith.constant 0 : i32
    %c0_i32_0 = arith.constant 0 : i32
    %c0_i32_1 = arith.constant 0 : i32
    return %arg0, %c0_i32, %c0_i32_0 : i32, i32, i32
  }
}

</mosaic_0001>

<llo_original>
// kernel: tpu_custom_call.1
$region0: #{tpu_custom_call.1}
  #allocation0 [shape = 'u32[]', space=smem, size = 0x4, offset = 0x4, fixed_abs, tag = 'smem constant byte address 0x4 - core index']
  #allocation1 [shape = 'u32[72,128]{1,0:T(1,128)}', space=vmem, size = 0x9000, scoped, tag = 'internal scratch']
  %s0 = inlined_call_operand.hbm [shape: f32[2,4,256], index: 0, kind: input, shape index: {}]
  %s1 = inlined_call_operand.vmem [shape: f32[8,36], index: 1, kind: input, shape index: {}]
  %s2 = inlined_call_operand.vmem [shape: f32[8,1], index: 2, kind: input, shape index: {}]
  %s3 = inlined_call_operand.hbm [shape: f32[2,8,256], index: 3, kind: output, shape index: {}]
  %s4 = sld [smem:[#allocation0]]
  $region49: #{tpu_custom_call.1} parent=0
    _
  %s6 = ssub.s32 1, %s4
  %s7 = scalar_select 0, %s6, %s4
  $region1: #{tpu_custom_call.1} parent=0
    #allocation2 [shape = 'u8[8192]{0}', space=vmem, size = 0x2000, scoped, tag = 'input window, operand 0']
    #allocation3 [shape = 's32[2]{0}', space=sflag, size = 0x8, scoped, tag = 'scoped memory for tpu_custom_call.1']
    #allocation4 [shape = 's32[2]{0}', space=sflag, size = 0x8, scoped, tag = 'scoped memory for tpu_custom_call.1']
    #allocation5 [shape = 'u8[16384]{0}', space=vmem, size = 0x4000, scoped, tag = 'output window, operand 0']
    %8 = vsyncpa [#allocation3], 0
    %s9 = scalar_lea.sflag [#allocation3], 1
    %10 = vsyncpa %s9, 0
    %11 = vsyncpa [#allocation4], 0
    %s12 = scalar_lea.sflag [#allocation4], 1
    %13 = vsyncpa %s12, 0
    loop: start=0, step=1, limit=4
    $region2: #{tpu_custom_call.1} parent=1 // loop_pre_header
      _
    $region3: #{tpu_custom_call.1} parent=1 // loop_header
      %s15 = sphi 0, %s19
      %p16 = scmp.ge.s32.totalorder %s15, 4
      %s25 = sphi 0, %s27
      %s28 = sphi 0, %s25
      %s29 = sphi 0, %s28
      %s45 = sphi 0, %s29
      %s49 = sphi 0, %s49
      %s51 = sphi 0, %s49
      %s52 = sphi 0, %s51
      %s66 = sphi 0, %s52
      %s70 = sphi 0, %s70
      %s72 = sphi 0, %s70
      %s73 = sphi 0, %s72
      %s87 = sphi 0, %s73
      %s93 = sphi 0, %s95
      %s96 = sphi 0, %s93
      %s97 = sphi 0, %s96
      %s113 = sphi 0, %s97
    $region4: #{tpu_custom_call.1} parent=1 // loop_header_branch
      %18 = sbr.rel (%p16) target = $region8
    $region5: #{tpu_custom_call.1} parent=1 // loop_body
      %s20 = ssub.s32 %s15, 1
      %s21 = ssub.s32 %s15, 2
      %s22 = sadd.s32 %s15, 1
      %s23 = ssub.s32 %s15, %s22
      %p24 = scmp.eq.s32.totalorder %s23, 0
      %s26 = sadd.s32 %s25, 1
      %s27 = scalar_select %p24, %s25, %s26
      %p30 = pneg %p24
      %p31 = scmp.eq.s32.totalorder %s15, 1
      %p32 = por %p30, %p31
      %p33 = scmp.ne.s32.totalorder %s25, %s28
      %p34 = scmp.eq.s32.totalorder %s15, 0
      %p35 = por %p33, %p34
      %p36 = scmp.ne.s32.totalorder %s25, %s28
      %p37 = scmp.eq.s32.totalorder %s20, 1
      %p38 = por %p36, %p37
      %p39 = scmp.ne.s32.totalorder %s28, %s29
      %p40 = scmp.eq.s32.totalorder %s20, 0
      %p41 = por %p39, %p40
      %p42 = scmp.ne.s32.totalorder %s28, %s29
      %p43 = scmp.eq.s32.totalorder %s21, 1
      %p44 = por %p42, %p43
      %p46 = scmp.ne.s32.totalorder %s29, %s45
      %p47 = scmp.eq.s32.totalorder %s21, 0
      %p48 = por %p46, %p47
      %s50 = sadd.s32 %s49, 1
      %p53 = scmp.eq.s32.totalorder %s15, 1
      %p54 = scmp.ne.s32.totalorder %s49, %s51
      %p55 = scmp.eq.s32.totalorder %s15, 0
      %p56 = por %p54, %p55
      %p57 = scmp.ne.s32.totalorder %s49, %s51
      %p58 = scmp.eq.s32.totalorder %s20, 1
      %p59 = por %p57, %p58
      %p60 = scmp.ne.s32.totalorder %s51, %s52
      %p61 = scmp.eq.s32.totalorder %s20, 0
      %p62 = por %p60, %p61
      %p63 = scmp.ne.s32.totalorder %s51, %s52
      %p64 = scmp.eq.s32.totalorder %s21, 1
      %p65 = por %p63, %p64
      %p67 = scmp.ne.s32.totalorder %s52, %s66
      %p68 = scmp.eq.s32.totalorder %s21, 0
      %p69 = por %p67, %p68
      %s71 = sadd.s32 %s70, 1
      %p74 = scmp.eq.s32.totalorder %s15, 1
      %p75 = scmp.ne.s32.totalorder %s70, %s72
      %p76 = scmp.eq.s32.totalorder %s15, 0
      %p77 = por %p75, %p76
      %p78 = scmp.ne.s32.totalorder %s70, %s72
      %p79 = scmp.eq.s32.totalorder %s20, 1
      %p80 = por %p78, %p79
      %p81 = scmp.ne.s32.totalorder %s72, %s73
      %p82 = scmp.eq.s32.totalorder %s20, 0
      %p83 = por %p81, %p82
      %p84 = scmp.ne.s32.totalorder %s72, %s73
      %p85 = scmp.eq.s32.totalorder %s21, 1
      %p86 = por %p84, %p85
      %p88 = scmp.ne.s32.totalorder %s73, %s87
      %p89 = scmp.eq.s32.totalorder %s21, 0
      %p90 = por %p88, %p89
      %s91 = ssub.s32 %s15, %s22
      %p92 = scmp.eq.s32.totalorder %s91, 0
      %s94 = sadd.s32 %s93, 1
      %s95 = scalar_select %p92, %s93, %s94
      %p98 = pneg %p92
      %p99 = scmp.eq.s32.totalorder %s15, 1
      %p100 = por %p98, %p99
      %p101 = scmp.ne.s32.totalorder %s93, %s96
      %p102 = scmp.eq.s32.totalorder %s15, 0
      %p103 = por %p101, %p102
      %p104 = scmp.ne.s32.totalorder %s93, %s96
      %p105 = scmp.eq.s32.totalorder %s20, 1
      %p106 = por %p104, %p105
      %p107 = scmp.ne.s32.totalorder %s96, %s97
      %p108 = scmp.eq.s32.totalorder %s20, 0
      %p109 = por %p107, %p108
      %p110 = scmp.ne.s32.totalorder %s96, %s97
      %p111 = scmp.eq.s32.totalorder %s21, 1
      %p112 = por %p110, %p111
      %p114 = scmp.ne.s32.totalorder %s97, %s113
      %p115 = scmp.eq.s32.totalorder %s21, 0
      %p116 = por %p114, %p115
      %p117 = scmp.le.s32.totalorder 1, %s15
      %p118 = scmp.lt.s32.totalorder %s15, 3
      %p119 = pnand %p117, %p118
      %p120 = pneg %p119
      // Predicated region
      $region9: #{tpu_custom_call.1} parent=5 // pred_check
        _
      $region10: #{tpu_custom_call.1} parent=5 // pred_check_branch
        %122 = sbr.rel (%p119) target = $region12
      $region11: #{tpu_custom_call.1} parent=5 // pred_region
        %s123 = ssub.s32 %s15, 1
        // Predicated region
        $region13: #{tpu_custom_call.1} parent=11 // pred_check
          %p124 = pneg %p62
        $region14: #{tpu_custom_call.1} parent=11 // pred_check_branch
          %126 = sbr.rel (%p124) target = $region16
        $region15: #{tpu_custom_call.1} parent=11 // pred_region
          _
        $region16: #{tpu_custom_call.1} parent=11 // pred_fallthru
          _
        // Predicated region
        $region17: #{tpu_custom_call.1} parent=11 // pred_check
          %p127 = pneg %p83
        $region18: #{tpu_custom_call.1} parent=11 // pred_check_branch
          %129 = sbr.rel (%p127) target = $region20
        $region19: #{tpu_custom_call.1} parent=11 // pred_region
          _
        $region20: #{tpu_custom_call.1} parent=11 // pred_fallthru
          _
      $region12: #{tpu_custom_call.1} parent=5 // pred_fallthru
        _
      %p130 = scmp.lt.s32.totalorder %s15, 2
      // Predicated region
      $region21: #{tpu_custom_call.1} parent=5 // pred_check
        %p131 = pneg %p130
      $region22: #{tpu_custom_call.1} parent=5 // pred_check_branch
        %133 = sbr.rel (%p131) target = $region24
      $region23: #{tpu_custom_call.1} parent=5 // pred_region
        // Predicated region
        $region25: #{tpu_custom_call.1} parent=23 // pred_check
          %p134 = pneg %p35
        $region26: #{tpu_custom_call.1} parent=23 // pred_check_branch
          %136 = sbr.rel (%p134) target = $region28
        $region27: #{tpu_custom_call.1} parent=23 // pred_region
          %s137 = sand.u32 %s25, 1
          %s138 = scalar_lea.sflag [#allocation3], %s137
          %s139 = sand.u32 %s25, 1
          %s140 = smul.addr %s139, 8
          %s141 = scalar_lea.vmem [#allocation2], %s140
          %143 = vsyncadd %s138, 0
          %s144 = smul.addr %s15, 2
          %s145 = smul.addr %s144, 4
          %s146 = scalar_lea.hbm %s0, %s145
          %s148 = sshll.u32 %s146, 4
          %s149 = int_to_ptr.hbm [resolvable:$true] %s148
          %s150 = sshll.u32 %s141, 4
          %s151 = int_to_ptr.vmem [resolvable:$true] %s150
          %153 = dma.hbm_to_vmem [thread:$0]  %s149, 128, %s151, %s138
        $region28: #{tpu_custom_call.1} parent=23 // pred_fallthru
          _
      $region24: #{tpu_custom_call.1} parent=5 // pred_fallthru
        _
      %p154 = scmp.le.s32.totalorder 1, %s15
      %p155 = scmp.lt.s32.totalorder %s15, 3
      %p156 = pnand %p154, %p155
      %p157 = pneg %p156
      // Predicated region
      $region29: #{tpu_custom_call.1} parent=5 // pred_check
        _
      $region30: #{tpu_custom_call.1} parent=5 // pred_check_branch
        %159 = sbr.rel (%p156) target = $region32
      $region31: #{tpu_custom_call.1} parent=5 // pred_region
        %s160 = ssub.s32 %s15, 1
        %s161 = sand.u32 %s28, 1
        %s162 = scalar_lea.sflag [#allocation3], %s161
        %s163 = sand.u32 %s28, 1
        %s164 = smul.addr %s163, 8
        %s165 = scalar_lea.vmem [#allocation2], %s164
        // Predicated region
        $region33: #{tpu_custom_call.1} parent=31 // pred_check
          %p166 = pneg %p41
        $region34: #{tpu_custom_call.1} parent=31 // pred_check_branch
          %168 = sbr.rel (%p166) target = $region36
        $region35: #{tpu_custom_call.1} parent=31 // pred_region
          %170 = dma.done %s162, 128
        $region36: #{tpu_custom_call.1} parent=31 // pred_fallthru
          _
        %s171 = sand.u32 %s28, 1
        %s172 = scalar_lea.sflag [#allocation3], %s171
        %s173 = sand.u32 %s28, 1
        %s174 = smul.addr %s173, 8
        %s175 = scalar_lea.vmem [#allocation2], %s174
        %p176 = pneg %p41
        %p177 = pneg %p38
        %p178 = pneg %p62
        %p179 = pneg %p59
        %p180 = pneg %p83
        %p181 = pneg %p80
        %p182 = pneg %p109
        %p183 = pneg %p106
        %s184 = sand.u32 %s96, 1
        %s185 = scalar_lea.sflag [#allocation4], %s184
        %s186 = sand.u32 %s96, 1
        %s187 = smul.addr %s186, 16
        %s188 = scalar_lea.vmem [#allocation5], %s187
        %v189 = vld [vmem:[%s165] sm:$0xff]
        %191 = vst [vmem:[#allocation1] ss:$2 sm:$0xff] %v189
        %v192 = vld.sshfl [vmem:[#allocation1] sm:$0xff pattern:$0x75316420]
        %v193 = vld.sshfl [vmem:[#allocation1 + $0x8] sm:$0xff pattern:$0x75316420]
        %196 = vrot.lane.b32.xlu0 %v192, 127
        %v197 = vpop.permute.xlu0 %196
        %198 = vrot.lane.b32.xlu0 %v193, 127
        %v199 = vpop.permute.xlu0 %198
        %v200 = vlaneseq
        %v201 = vand.u32 %v200, 127
        %vm202 = vcmp.lt.s32.totalorder %v201, 127
        %v203 = vsel %vm202, %v197, %v199
        %v204 = vsel %vm202, %v199, %v197
        %205 = vst [vmem:[#allocation1] ss:$2 sm:$0xff] %v189
        %v206 = vld.sshfl [vmem:[#allocation1] sm:$0xff pattern:$0x75316420]
        %v207 = vld.sshfl [vmem:[#allocation1 + $0x8] sm:$0xff pattern:$0x75316420]
        %210 = vrot.lane.b32.xlu0 %v206, 126
        %v211 = vpop.permute.xlu0 %210
        %212 = vrot.lane.b32.xlu0 %v207, 126
        %v213 = vpop.permute.xlu0 %212
        %vm214 = vcmp.lt.s32.totalorder %v201, 126
        %v215 = vsel %vm214, %v211, %v213
        %v216 = vsel %vm214, %v213, %v211
        %217 = vst [vmem:[#allocation1] ss:$2 sm:$0xff] %v189
        %v218 = vld.sshfl [vmem:[#allocation1] sm:$0xff pattern:$0x75316420]
        %v219 = vld.sshfl [vmem:[#allocation1 + $0x8] sm:$0xff pattern:$0x75316420]
        %222 = vrot.lane.b32.xlu0 %v218, 112
        %v223 = vpop.permute.xlu0 %222
        %224 = vrot.lane.b32.xlu0 %v219, 112
        %v225 = vpop.permute.xlu0 %224
        %vm226 = vcmp.lt.s32.totalorder %v201, 112
        %v227 = vsel %vm226, %v223, %v225
        %v228 = vsel %vm226, %v225, %v223
        %229 = vst [vmem:[#allocation1] ss:$2 sm:$0xff] %v189
        %v230 = vld.sshfl [vmem:[#allocation1] sm:$0xff pattern:$0x75316420]
        %v231 = vld.sshfl [vmem:[#allocation1 + $0x8] sm:$0xff pattern:$0x75316420]
        %234 = vrot.lane.b32.xlu0 %v230, 111
        %v235 = vpop.permute.xlu0 %234
        %236 = vrot.lane.b32.xlu0 %v231, 111
        %v237 = vpop.permute.xlu0 %236
        %vm238 = vcmp.lt.s32.totalorder %v201, 111
        %v239 = vsel %vm238, %v235, %v237
        %v240 = vsel %vm238, %v237, %v235
        %241 = vst [vmem:[#allocation1] ss:$2 sm:$0xff] %v189
        %v242 = vld.sshfl [vmem:[#allocation1] sm:$0xff pattern:$0x75316420]
        %v243 = vld.sshfl [vmem:[#allocation1 + $0x8] sm:$0xff pattern:$0x75316420]
        %246 = vrot.lane.b32.xlu0 %v242, 110
        %v247 = vpop.permute.xlu0 %246
        %248 = vrot.lane.b32.xlu0 %v243, 110
        %v249 = vpop.permute.xlu0 %248
        %vm250 = vcmp.lt.s32.totalorder %v201, 110
        %v251 = vsel %vm250, %v247, %v249
        %v252 = vsel %vm250, %v249, %v247
        %253 = vst [vmem:[#allocation1] ss:$2 sm:$0xff] %v189
        %v254 = vld.sshfl [vmem:[#allocation1] sm:$0xff pattern:$0x75316420]
        %v255 = vld.sshfl [vmem:[#allocation1 + $0x8] sm:$0xff pattern:$0x75316420]
        %258 = vrot.lane.b32.xlu0 %v254, 96
        %v259 = vpop.permute.xlu0 %258
        %260 = vrot.lane.b32.xlu0 %v255, 96
        %v261 = vpop.permute.xlu0 %260
        %vm262 = vcmp.lt.s32.totalorder %v201, 96
        %v263 = vsel %vm262, %v259, %v261
        %v264 = vsel %vm262, %v261, %v259
        %265 = vst [vmem:[#allocation1] ss:$2 sm:$0xff] %v189
        %v266 = vld.sshfl [vmem:[#allocation1] sm:$0xff pattern:$0x75316420]
        %v267 = vld.sshfl [vmem:[#allocation1 + $0x8] sm:$0xff pattern:$0x75316420]
        %270 = vrot.lane.b32.xlu0 %v266, 95
        %v271 = vpop.permute.xlu0 %270
        %272 = vrot.lane.b32.xlu0 %v267, 95
        %v273 = vpop.permute.xlu0 %272
        %vm274 = vcmp.lt.s32.totalorder %v201, 95
        %v275 = vsel %vm274, %v271, %v273
        %v276 = vsel %vm274, %v273, %v271
        %277 = vst [vmem:[#allocation1] ss:$2 sm:$0xff] %v189
        %v278 = vld.sshfl [vmem:[#allocation1] sm:$0xff pattern:$0x75316420]
        %v279 = vld.sshfl [vmem:[#allocation1 + $0x8] sm:$0xff pattern:$0x75316420]
        %282 = vrot.lane.b32.xlu0 %v278, 94
        %v283 = vpop.permute.xlu0 %282
        %284 = vrot.lane.b32.xlu0 %v279, 94
        %v285 = vpop.permute.xlu0 %284
        %vm286 = vcmp.lt.s32.totalorder %v201, 94
        %v287 = vsel %vm286, %v283, %v285
        %v288 = vsel %vm286, %v285, %v283
        %v291 = vrot.slane %v204, 4
        %vm292 = vcmask 1043456
        %v293 = vsel %vm292, %v203, %v291
        %v296 = vrot.slane %v216, 4
        %v297 = vsel %vm292, %v215, %v296
        %v300 = vrot.slane %v228, 4
        %v301 = vsel %vm292, %v227, %v300
        %v304 = vrot.slane %v240, 4
        %v305 = vsel %vm292, %v239, %v304
        %v308 = vrot.slane %v252, 4
        %v309 = vsel %vm292, %v251, %v308
        %v312 = vrot.slane %v264, 4
        %v313 = vsel %vm292, %v263, %v312
        %v316 = vrot.slane %v276, 4
        %v317 = vsel %vm292, %v275, %v316
        %v320 = vrot.slane %v288, 4
        %v321 = vsel %vm292, %v287, %v320
        %v322 = vld [vmem:[%s1] sm:$0xff]
        %v323 = vld [vmem:[%s2] sm:$0xff]
        %325 = vset.pattern.permute.xlu0 0
        %326 = vperm.xlu0 %325, %v323
        %v327 = vpop.permute.xlu0 %326
        %329 = vst [vmem:[#allocation1] ss:$2 sm:$0xff] %v189
        %s330 = scalar_lea.vmem [#allocation1], 1
        %331 = vst [vmem:[%s330] ss:$2 sm:$0xff] %v293
        %s332 = scalar_lea.vmem [#allocation1], 16
        %333 = vst [vmem:[%s332] ss:$2 sm:$0xff] %v297
        %s334 = scalar_lea.vmem [#allocation1], 17
        %335 = vst [vmem:[%s334] ss:$2 sm:$0xff] %v301
        %s336 = scalar_lea.vmem [#allocation1], 32
        %337 = vst [vmem:[%s336] ss:$2 sm:$0xff] %v305
        %s338 = scalar_lea.vmem [#allocation1], 33
        %339 = vst [vmem:[%s338] ss:$2 sm:$0xff] %v309
        %s340 = scalar_lea.vmem [#allocation1], 48
        %341 = vst [vmem:[%s340] ss:$2 sm:$0xff] %v313
        %s342 = scalar_lea.vmem [#allocation1], 49
        %343 = vst [vmem:[%s342] ss:$2 sm:$0xff] %v317
        %v344 = vld.sshfl [vmem:[#allocation1] sm:$0xff pattern:$0x75316420]
        %v345 = vld.sshfl [vmem:[#allocation1 + $0x8] sm:$0xff pattern:$0x75316420]
        %v346 = vld.sshfl [vmem:[#allocation1 + $0x10] sm:$0xff pattern:$0x75316420]
        %v347 = vld.sshfl [vmem:[#allocation1 + $0x18] sm:$0xff pattern:$0x75316420]
        %v348 = vld.sshfl [vmem:[#allocation1 + $0x20] sm:$0xff pattern:$0x75316420]
        %v349 = vld.sshfl [vmem:[#allocation1 + $0x28] sm:$0xff pattern:$0x75316420]
        %v350 = vld.sshfl [vmem:[#allocation1 + $0x30] sm:$0xff pattern:$0x75316420]
        %v351 = vld.sshfl [vmem:[#allocation1 + $0x38] sm:$0xff pattern:$0x75316420]
        %352 = vst [vmem:[#allocation1] ss:$2 sm:$0xff] %v321
        %v353 = vld.sshfl [vmem:[#allocation1] sm:$0xff pattern:$0x75316420]
        %v354 = vld.sshfl [vmem:[#allocation1 + $0x8] sm:$0xff pattern:$0x75316420]
        %vm363 = vcmask 293888
        %v365 = vsel %vm363, %v322, 0
        %v367 = vsel %vm292, %v353, 0
        %v369 = vsel %vm292, %v354, 0
        %371 = vmatpush.msra.mxu0 0.0
        %372 = vmatpush.msra.mxu0 0.0
        %373 = vmatpush.msra.mxu0 0.0
        %374 = vmatpush.msra.mxu0 0.0
        %375 = vmatpush.msra.mxu0 0.0
        %376 = vmatpush.msra.mxu0 0.0
        %377 = vmatpush.msra.mxu0 0.0
        %378 = vmatpush.msra.mxu0 0.0
        %379 = vmatpush.msra.mxu0 0.0
        %380 = vmatpush.msra.mxu0 0.0
        %381 = vmatpush.msra.mxu0 0.0
        %382 = vmatpush.msra.mxu0 %v367
        %383 = vmatpush.msra.mxu0 %v350
        %384 = vmatpush.msra.mxu0 %v348
        %385 = vmatpush.msra.mxu0 %v346
        %386 = vmatpush.msra.mxu0 %v344
        %387 = vmatmul.f32.gmra.mxu0 %v365
        %v388 = vpop.f32.mrf.mxu0
        %v389 = vadd.f32 %v327, %v388
        %390 = vdwg.mxu0
        %391 = vmatpush.msra.mxu0 0.0
        %392 = vmatpush.msra.mxu0 0.0
        %393 = vmatpush.msra.mxu0 0.0
        %394 = vmatpush.msra.mxu0 0.0
        %395 = vmatpush.msra.mxu0 0.0
        %396 = vmatpush.msra.mxu0 0.0
        %397 = vmatpush.msra.mxu0 0.0
        %398 = vmatpush.msra.mxu0 0.0
        %399 = vmatpush.msra.mxu0 0.0
        %400 = vmatpush.msra.mxu0 0.0
        %401 = vmatpush.msra.mxu0 0.0
        %402 = vmatpush.msra.mxu0 %v369
        %403 = vmatpush.msra.mxu0 %v351
        %404 = vmatpush.msra.mxu0 %v349
        %405 = vmatpush.msra.mxu0 %v347
        %406 = vmatpush.msra.mxu0 %v345
        %407 = vmatmul.f32.gmra.mxu0 %v365
        %v408 = vpop.f32.mrf.mxu0
        %v409 = vadd.f32 %v327, %v408
        %410 = vdwg.mxu0
        %411 = vst [vmem:[%s188] sm:$0xff] %v389
        %412 = vst [vmem:[%s188 + $0x8] sm:$0xff] %v409
        %s413 = sand.u32 %s96, 1
        %s414 = scalar_lea.sflag [#allocation4], %s413
        %s415 = sand.u32 %s96, 1
        %s416 = smul.addr %s415, 16
        %s417 = scalar_lea.vmem [#allocation5], %s416
        // Predicated region
        $region37: #{tpu_custom_call.1} parent=31 // pred_check
          %p418 = pneg %p106
        $region38: #{tpu_custom_call.1} parent=31 // pred_check_branch
          %420 = sbr.rel (%p418) target = $region40
        $region39: #{tpu_custom_call.1} parent=31 // pred_region
          %422 = vsyncadd %s414, 0
          %s423 = smul.addr %s20, 2
          %s424 = smul.addr %s423, 8
          %s425 = scalar_lea.hbm %s3, %s424
          %s427 = sshll.u32 %s417, 4
          %s428 = int_to_ptr.vmem [resolvable:$true] %s427
          %s429 = sshll.u32 %s425, 4
          %s430 = int_to_ptr.hbm [resolvable:$true] %s429
          %432 = dma.vmem_to_hbm [thread:$0]  %s428, 256, %s430, %s414
        $region40: #{tpu_custom_call.1} parent=31 // pred_fallthru
          _
      $region32: #{tpu_custom_call.1} parent=5 // pred_fallthru
        _
      %p433 = scmp.le.s32.totalorder 2, %s15
      // Predicated region
      $region41: #{tpu_custom_call.1} parent=5 // pred_check
        %p434 = pneg %p433
      $region42: #{tpu_custom_call.1} parent=5 // pred_check_branch
        %436 = sbr.rel (%p434) target = $region44
      $region43: #{tpu_custom_call.1} parent=5 // pred_region
        %s437 = ssub.s32 %s15, 2
        // Predicated region
        $region45: #{tpu_custom_call.1} parent=43 // pred_check
          %p438 = pneg %p112
        $region46: #{tpu_custom_call.1} parent=43 // pred_check_branch
          %440 = sbr.rel (%p438) target = $region48
        $region47: #{tpu_custom_call.1} parent=43 // pred_region
          %s441 = sand.u32 %s97, 1
          %s442 = scalar_lea.sflag [#allocation4], %s441
          %s443 = sand.u32 %s97, 1
          %s444 = smul.addr %s443, 16
          %s445 = scalar_lea.vmem [#allocation5], %s444
          %447 = dma.done %s442, 256
        $region48: #{tpu_custom_call.1} parent=43 // pred_fallthru
          _
      $region44: #{tpu_custom_call.1} parent=5 // pred_fallthru
        _
    $region6: #{tpu_custom_call.1} parent=1 // loop_footer
      %s19 = sadd.s32 1, %s15
    $region7: #{tpu_custom_call.1} parent=1 // loop_footer_branch
      %14 = sbr.rel target = $region3
    $region8: #{tpu_custom_call.1} parent=1 // loop_exit
      _
    %448 = vsyncpa [#allocation3], 1
    %s449 = scalar_lea.sflag [#allocation3], 1
    %450 = vsyncpa %s449, 1
    %451 = vsyncpa [#allocation4], 1
    %s452 = scalar_lea.sflag [#allocation4], 1
    %453 = vsyncpa %s452, 1

</llo_original>
